<compile_context>
chip_gen: v5e
topology: v5e:2x2
jax: 0.10.0
libtpu: 0.0.40
codegen_flags: <defaults>
</compile_context>

<pallas_src>
import functools

import jax
import jax.numpy as jnp
from jax import lax
from jax.experimental import pallas as pl
from jax.experimental.pallas import tpu as pltpu

# fixed DeconvBlock conv parameters (module defaults)
_K, _S, _PAD, _OPAD = 3, 2, 1, 1
_EPS = 1e-5


def _taps(d):
    """(input-offset a, kernel-tap k) pairs contributing to output phase d."""
    out = []
    for a in range(_K):
        k = d + _PAD - _S * a
        if 0 <= k < _K:
            out.append((a, k))
    return out


def _vmem_capacity_bytes():
    """Physical VMEM of the attached TPU (fallback: 64 MiB, the v7x minimum)."""
    try:
        cap = int(pltpu.get_tpu_info().vmem_capacity_bytes)
        if cap > 0:
            return cap
    except Exception:
        pass
    return 64 * 1024 * 1024


def _choose_tiling(hw, spatial_tile, target):
    """Pick (tile, n_tiles); tile is a multiple of 128 (lane-dense stores)."""
    if spatial_tile is not None:
        assert spatial_tile % 128 == 0, "spatial_tile must be a multiple of 128"
        return spatial_tile, pl.cdiv(hw, spatial_tile)
    target = max(128, (target // 128) * 128)
    hw128 = pl.cdiv(hw, 128) * 128
    if hw128 <= target:
        return hw128, 1
    n_tiles = pl.cdiv(hw, target)
    tile = pl.cdiv(hw, n_tiles * 128) * 128        # padding overhead < n_tiles*128
    return tile, n_tiles


def _deconv_in_relu_kernel(p_ref, w_ref, o_ref, stats_ref, *acc_rest,
                           n_phase, total_px, acc_resident):
    # p_ref:     (1, 4*Cin, tile)           bf16 patch tile (lane-dense spatial)
    # w_ref:     (1, n_phase, Cpg, 4*Cin)   packed per-phase weights (resident)
    # o_ref:     (1, 1, n_phase, Cpg, tile) phase-major output tile
    # stats_ref: (2, Cpg, 1) f32            running [sum, sum_of_squares] / channel
    # acc_rest:  optional (n_tiles, n_phase, Cpg, tile) f32 resident accumulator
    acc_ref = acc_rest[0] if acc_resident else None
    pss = pl.program_id(2)     # 0: accumulate statistics, 1: normalize + write
    t = pl.program_id(3)       # spatial tile

    @pl.when(jnp.logical_and(pss == 0, t == 0))
    def _init():
        stats_ref[...] = jnp.zeros_like(stats_ref)

    @pl.when(pss == 0)
    def _stats_pass():
        p = p_ref[0]                                         # (4*Cin, tile)
        for ph in range(n_phase):                            # per-phase: small f32 set
            blk = jnp.dot(w_ref[0, ph], p, preferred_element_type=jnp.float32)
            stats_ref[0] += jnp.sum(blk, axis=-1, keepdims=True)
            stats_ref[1] += jnp.sum(blk * blk, axis=-1, keepdims=True)
            if acc_resident:
                acc_ref[t, ph, :, :] = blk                   # keep for the write pass
        # NOTE: no output store here; the out index_map pins the output block on
        # pass 0, so nothing is ever written back to HBM on the stats pass.

    @pl.when(pss == 1)
    def _write_pass():
        inv_n = jnp.float32(1.0 / total_px)
        mean = stats_ref[0] * inv_n                          # (Cpg, 1)
        # E[x^2] - E[x]^2 in f32; adequate for typical activation scales/images.
        var = stats_ref[1] * inv_n - mean * mean
        inv_std = lax.rsqrt(var + jnp.float32(_EPS))
        p = None if acc_resident else p_ref[0]
        for ph in range(n_phase):
            if acc_resident:
                blk = acc_ref[t, ph, :, :]                   # read back from VMEM
            else:
                blk = jnp.dot(w_ref[0, ph], p, preferred_element_type=jnp.float32)
            y = jnp.maximum((blk - mean) * inv_std, 0.0)     # InstanceNorm + ReLU
            o_ref[0, 0, ph, :, :] = y.astype(o_ref.dtype)


def deconv_block(x_nchw, weight_t, bias=None, *,
                 activation="relu", batch_norm=True,
                 out_dtype=jnp.bfloat16, compute_dtype=jnp.bfloat16,
                 spatial_tile=None, tile_target=1024,
                 channel_groups=1, acc_resident=None):
    """Forward of DeconvBlock (activation='relu', batch_norm=True).

    x_nchw:   (N, Cin, H, W)
    weight_t: (Cin, Cout, 3, 3)  nn.ConvTranspose2d weight layout
    bias:     accepted for API parity but unused on this path: a per-channel
              constant added before affine=False InstanceNorm is cancelled
              exactly by the mean subtraction and does not change the variance.
    returns:  (N, Cout, 2H, 2W) in `out_dtype` (bf16 by default; pass
              jnp.float32 for exact dtype parity with the PyTorch module).
    """
    if activation != "relu" or not batch_norm:
        # TODO(synk): 'lrelu'/'tanh'/'no_act' and the batch_norm=False branch
        # (where the conv bias matters) are not implemented in this kernel.
        raise NotImplementedError("only activation='relu', batch_norm=True")
    del bias

    N, Cin, H, W = x_nchw.shape
    wCin, Cout, K, K2 = weight_t.shape
    assert (wCin, K, K2) == (Cin, _K, _K)
    G = channel_groups
    assert Cout % G == 0, "channel_groups must divide Cout"
    Cpg = Cout // G

    A = max(a for d in range(_S) for a, _ in _taps(d)) + 1   # taps per axis (= 2)
    n_phase = _S * _S                                        # 4 output phases
    HW = H * W
    Ho, Wo = _S * H, _S * W                                  # op=1 -> exactly 2H, 2W

    tile, n_tiles = _choose_tiling(HW, spatial_tile, tile_target)
    HWp = tile * n_tiles                   # lane axis padded to x128 -> dense stores

    # ---- glue (plain JAX, no transposes): 2x2-tap patches straight from NCHW
    x_pad = jnp.pad(x_nchw, ((0, 0), (0, 0), (0, A - 1), (0, A - 1)))
    cols = [x_pad[:, :, a:a + H, b:b + W].reshape(N, Cin, HW)
            for a in range(A) for b in range(A)]
    patches = jnp.concatenate(cols, axis=1)                  # (N, 4*Cin, HW)
    if HWp != HW:
        # zero columns contribute 0 to sum / sum_sq -> statistics stay exact
        patches = jnp.pad(patches, ((0, 0), (0, 0), (0, HWp - HW)))
    patches = patches.astype(compute_dtype)

    # ---- packed per-phase / per-channel-group weights: (G, n_phase, Cpg, 4*Cin)
    w_all = jnp.zeros((G, n_phase, Cpg, A * A * Cin), jnp.float32)
    for dy in range(_S):
        for dx in range(_S):
            ph = dy * _S + dx
            for a, ky in _taps(dy):
                for b, kx in _taps(dx):
                    blk = weight_t[:, :, ky, kx].T.reshape(G, Cpg, Cin)
                    w_all = w_all.at[:, ph, :,
                                     (a * A + b) * Cin:(a * A + b + 1) * Cin].set(blk)
    w_all = w_all.astype(compute_dtype)

    # ---- VMEM budgeting (generation-aware: ~64 MiB on v7x, 128 MiB on v5e/v6e)
    cb = jnp.dtype(compute_dtype).itemsize
    ob = jnp.dtype(out_dtype).itemsize
    vmem_cap = _vmem_capacity_bytes()
    acc_bytes = n_tiles * n_phase * max(Cpg, 8) * tile * 4
    fixed_bytes = (2 * n_phase * max(Cpg, 8) * A * A * Cin * cb   # weights (2 bufs)
                   + 2 * A * A * Cin * tile * cb                  # patch double buffer
                   + 2 * n_phase * max(Cpg, 8) * tile * ob        # output double buffer
                   + 256 * 1024)                                  # stats + headroom
    if acc_resident is None:       # single-pass fast path when the accumulator fits
        acc_resident = acc_bytes + fixed_bytes <= int(0.65 * vmem_cap)
    vmem_limit = min(int(0.9 * vmem_cap), 120 * 1024 * 1024)

    kernel = functools.partial(_deconv_in_relu_kernel, n_phase=n_phase,
                               total_px=Ho * Wo, acc_resident=acc_resident)

    scratch = [pltpu.VMEM((2, Cpg, 1), jnp.float32)]
    if acc_resident:
        scratch.append(pltpu.VMEM((n_tiles, n_phase, Cpg, tile), jnp.float32))

    if acc_resident:
        # pass 1 reads the accumulator from VMEM -> pin the patch block (no re-read)
        patches_map = lambda n, g, p, t: (n, 0, t * (1 - p))
    else:
        patches_map = lambda n, g, p, t: (n, 0, t)           # recompute on pass 1

    out = pl.pallas_call(
        kernel,
        out_shape=jax.ShapeDtypeStruct((N, G, n_phase, Cpg, HWp), out_dtype),
        grid_spec=pltpu.PrefetchScalarGridSpec(
            num_scalar_prefetch=0,
            # batch | channel group | stats-pass / write-pass | spatial tile
            grid=(N, G, 2, n_tiles),
            in_specs=[
                pl.BlockSpec((1, A * A * Cin, tile), patches_map),
                pl.BlockSpec((1, n_phase, Cpg, A * A * Cin),
                             lambda n, g, p, t: (g, 0, 0, 0)),
            ],
            # pass 0 pins the output block (t * p == 0) -> no stats-pass writeback
            out_specs=pl.BlockSpec((1, 1, n_phase, Cpg, tile),
                                   lambda n, g, p, t: (n, g, 0, 0, t * p)),
            scratch_shapes=scratch,
        ),
        compiler_params=pltpu.CompilerParams(
            dimension_semantics=("parallel", "parallel", "arbitrary", "arbitrary"),
            vmem_limit_bytes=vmem_limit,
        ),
    )(patches, w_all)

    # ---- pixel shuffle: (N, G, dy, dx, Cpg, H, W) -> (N, Cout, 2H, 2W), on bf16
    # TODO(synk): fold this dy/dx interleave into the kernel's stores (XLU lane
    # interleave) to remove the remaining XLA transpose round-trip of the output.
    out = out[:, :, :, :, :HW].reshape(N, G, _S, _S, Cpg, H, W)
    out = jnp.transpose(out, (0, 1, 4, 5, 2, 6, 3)).reshape(N, Cout, Ho, Wo)
    return out


def _reference(x_nchw, weight_t, bias):
    """Pure-JAX reference (PyTorch-faithful, incl. conv bias), all f32."""
    Cin, Cout, K, _ = weight_t.shape
    w_oihw = jnp.transpose(weight_t[:, :, ::-1, ::-1], (1, 0, 2, 3))
    lo = K - 1 - _PAD
    hi = K - 1 - _PAD + _OPAD
    y = lax.conv_general_dilated(
        x_nchw, w_oihw, window_strides=(1, 1),
        padding=[(lo, hi), (lo, hi)], lhs_dilation=(_S, _S),
        dimension_numbers=("NCHW", "OIHW", "NCHW"))
    y = y + bias.reshape(1, Cout, 1, 1)
    mean = jnp.mean(y, axis=(2, 3), keepdims=True)
    var = jnp.mean(jnp.square(y - mean), axis=(2, 3), keepdims=True)
    y = (y - mean) * lax.rsqrt(var + _EPS)
    return jnp.maximum(y, 0.0)


if __name__ == "__main__":
    # DeconvBlock(input_size=4, output_size=8) at a small spatial size
    N, Cin, Cout, H, W = 2, 4, 8, 16, 16

    key = jax.random.PRNGKey(0)
    kx, kw, kb = jax.random.split(key, 3)
    x = jax.random.normal(kx, (N, Cin, H, W), dtype=jnp.float32)
    weight_t = 0.1 * jax.random.normal(kw, (Cin, Cout, _K, _K), dtype=jnp.float32)
    bias = 0.1 * jax.random.normal(kb, (Cout,), dtype=jnp.float32)

    # pre-round operands to bf16 so the kernel (bf16 MXU operands, f32 accumulation)
    # and the f32 reference see identical values.
    xq = x.astype(jnp.bfloat16).astype(jnp.float32)
    wq = weight_t.astype(jnp.bfloat16).astype(jnp.float32)
    y_ref = jax.block_until_ready(_reference(xq, wq, bias))

    # (config, tolerance): f32 output -> tight check; bf16 output -> the final
    # output cast dominates the error budget (~1 bf16 ulp of values up to ~4).
    cases = [
        (dict(out_dtype=jnp.float32), 2e-3),                 # resident acc, single tile
        (dict(spatial_tile=128, channel_groups=2), 3e-2),    # 2 tiles, 2 channel groups
        (dict(spatial_tile=128, acc_resident=False), 3e-2),  # recompute (two-read) path
    ]
    for cfg, tol in cases:
        y = jax.block_until_ready(deconv_block(xq, wq, bias, **cfg))
        assert y.shape == (N, Cout, _S * H, _S * W), (cfg, y.shape)
        err = float(jnp.max(jnp.abs(y.astype(jnp.float32) - y_ref)))
        assert err < tol, (cfg, err)

    print("KERNEL_OK")
</pallas_src>

<mosaic_0001>
module attributes {stable_mosaic.version = 11 : i64} {
  func.func @_deconv_in_relu_kernel(%arg0: i32, %arg1: i32, %arg2: i32, %arg3: i32, %arg4: memref<1x16x256xbf16, #tpu.memory_space<vmem>>, %arg5: memref<1x4x8x16xbf16, #tpu.memory_space<vmem>>, %arg6: memref<1x1x4x8x256xf32, #tpu.memory_space<vmem>>, %arg7: memref<2x8x1xf32, #tpu.memory_space<vmem>>, %arg8: memref<1x4x8x256xf32, #tpu.memory_space<vmem>>) attributes {dimension_semantics = [#tpu.dimension_semantics<parallel>, #tpu.dimension_semantics<parallel>, #tpu.dimension_semantics<arbitrary>, #tpu.dimension_semantics<arbitrary>], iteration_bounds = array<i64: 2, 1, 2, 1>, scalar_prefetch = 0 : i64, scratch_operands = 2 : i64, tpu.core_type = #tpu.core_type<tc>, window_params = [{transform_indices = @transform_0, window_bounds = array<i64: 1, 16, 256>}, {transform_indices = @transform_1, window_bounds = array<i64: 1, 4, 8, 16>}, {transform_indices = @transform_2, window_bounds = array<i64: 1, 1, 4, 8, 256>}]} {
    %c0_i32 = arith.constant 0 : i32
    %0 = arith.cmpi eq, %arg2, %c0_i32 : i32
    %c0_i32_0 = arith.constant 0 : i32
    %1 = arith.cmpi eq, %arg3, %c0_i32_0 : i32
    %2 = arith.andi %0, %1 : i1
    %3 = arith.extui %2 : i1 to i32
    %c0_i32_1 = arith.constant 0 : i32
    %4 = arith.cmpi ne, %3, %c0_i32_1 : i32
    scf.if %4 {
      %cst = arith.constant 0.000000e+00 : f32
      %11 = vector.broadcast %cst : f32 to vector<2x8x1xf32>
      %c0 = arith.constant 0 : index
      %c0_5 = arith.constant 0 : index
      %c0_6 = arith.constant 0 : index
      %12 = vector.load %arg7[%c0, %c0_5, %c0_6] : memref<2x8x1xf32, #tpu.memory_space<vmem>>, vector<2x8x1xf32>
      tpu.vector_store %arg7[%c0, %c0_5, %c0_6], %11 {strides = array<i32>} : memref<2x8x1xf32, #tpu.memory_space<vmem>>, vector<2x8x1xf32>,
    } else {
    }
    %c0_i32_2 = arith.constant 0 : i32
    %5 = arith.cmpi eq, %arg2, %c0_i32_2 : i32
    %6 = arith.extui %5 : i1 to i32
    %c0_i32_3 = arith.constant 0 : i32
    %7 = arith.cmpi ne, %6, %c0_i32_3 : i32
    scf.if %7 {
      %c0 = arith.constant 0 : index
      %c0_5 = arith.constant 0 : index
      %c0_6 = arith.constant 0 : index
      %11 = vector.load %arg4[%c0, %c0_5, %c0_6] : memref<1x16x256xbf16, #tpu.memory_space<vmem>>, vector<1x16x256xbf16>
      %12 = vector.shape_cast %11 : vector<1x16x256xbf16> to vector<16x256xbf16>
      %c0_7 = arith.constant 0 : index
      %c0_8 = arith.constant 0 : index
      %c0_9 = arith.constant 0 : index
      %c0_10 = arith.constant 0 : index
      %13 = vector.load %arg5[%c0_7, %c0_8, %c0_9, %c0_10] : memref<1x4x8x16xbf16, #tpu.memory_space<vmem>>, vector<1x1x8x16xbf16>
      %14 = vector.shape_cast %13 : vector<1x1x8x16xbf16> to vector<8x16xbf16>
      %cst = arith.constant dense<0.000000e+00> : vector<8x256xf32>
      %15 = tpu.matmul %14, %12, %cst {dimension_numbers = #tpu.dot_dimension_numbers<[1], [0], [0], [1], [0, 0, 1, 1], [], []>} : vector<8x16xbf16>, vector<16x256xbf16>, vector<8x256xf32> -> vector<8x256xf32>
      %c0_11 = arith.constant 0 : index
      %c0_12 = arith.constant 0 : index
      %c0_13 = arith.constant 0 : index
      %16 = vector.load %arg7[%c0_11, %c0_12, %c0_13] : memref<2x8x1xf32, #tpu.memory_space<vmem>>, vector<1x8x1xf32>
      %17 = vector.shape_cast %16 : vector<1x8x1xf32> to vector<8x1xf32>
      %cst_14 = arith.constant dense<0.000000e+00> : vector<8xf32>
      %18 = vector.multi_reduction <add>, %15, %cst_14 [1] : vector<8x256xf32> to vector<8xf32>
      %19 = vector.shape_cast %18 : vector<8xf32> to vector<8x1xf32>
      %20 = arith.addf %17, %19 : vector<8x1xf32>
      %c0_15 = arith.constant 0 : index
      %c0_16 = arith.constant 0 : index
      %c0_17 = arith.constant 0 : index
      %21 = vector.load %arg7[%c0_15, %c0_16, %c0_17] : memref<2x8x1xf32, #tpu.memory_space<vmem>>, vector<1x8x1xf32>
      %22 = vector.shape_cast %21 : vector<1x8x1xf32> to vector<8x1xf32>
      %23 = vector.shape_cast %20 : vector<8x1xf32> to vector<1x8x1xf32>
      tpu.vector_store %arg7[%c0_15, %c0_16, %c0_17], %23 {strides = array<i32>} : memref<2x8x1xf32, #tpu.memory_space<vmem>>, vector<1x8x1xf32>,
      %c1 = arith.constant 1 : index
      %c0_18 = arith.constant 0 : index
      %c0_19 = arith.constant 0 : index
      %24 = vector.load %arg7[%c1, %c0_18, %c0_19] : memref<2x8x1xf32, #tpu.memory_space<vmem>>, vector<1x8x1xf32>
      %25 = vector.shape_cast %24 : vector<1x8x1xf32> to vector<8x1xf32>
      %26 = arith.mulf %15, %15 : vector<8x256xf32>
      %cst_20 = arith.constant dense<0.000000e+00> : vector<8xf32>
      %27 = vector.multi_reduction <add>, %26, %cst_20 [1] : vector<8x256xf32> to vector<8xf32>
      %28 = vector.shape_cast %27 : vector<8xf32> to vector<8x1xf32>
      %29 = arith.addf %25, %28 : vector<8x1xf32>
      %c1_21 = arith.constant 1 : index
      %c0_22 = arith.constant 0 : index
      %c0_23 = arith.constant 0 : index
      %30 = vector.load %arg7[%c1_21, %c0_22, %c0_23] : memref<2x8x1xf32, #tpu.memory_space<vmem>>, vector<1x8x1xf32>
      %31 = vector.shape_cast %30 : vector<1x8x1xf32> to vector<8x1xf32>
      %32 = vector.shape_cast %29 : vector<8x1xf32> to vector<1x8x1xf32>
      tpu.vector_store %arg7[%c1_21, %c0_22, %c0_23], %32 {strides = array<i32>} : memref<2x8x1xf32, #tpu.memory_space<vmem>>, vector<1x8x1xf32>,
      %33 = arith.index_cast %arg3 : i32 to index
      %c0_24 = arith.constant 0 : index
      %c0_25 = arith.constant 0 : index
      %c0_26 = arith.constant 0 : index
      %34 = vector.load %arg8[%33, %c0_24, %c0_25, %c0_26] : memref<1x4x8x256xf32, #tpu.memory_space<vmem>>, vector<1x1x8x256xf32>
      %35 = vector.shape_cast %34 : vector<1x1x8x256xf32> to vector<8x256xf32>
      %36 = vector.shape_cast %15 : vector<8x256xf32> to vector<1x1x8x256xf32>
      tpu.vector_store %arg8[%33, %c0_24, %c0_25, %c0_26], %36 {strides = array<i32>} : memref<1x4x8x256xf32, #tpu.memory_space<vmem>>, vector<1x1x8x256xf32>,
      %c0_27 = arith.constant 0 : index
      %c1_28 = arith.constant 1 : index
      %c0_29 = arith.constant 0 : index
      %c0_30 = arith.constant 0 : index
      %37 = vector.load %arg5[%c0_27, %c1_28, %c0_29, %c0_30] : memref<1x4x8x16xbf16, #tpu.memory_space<vmem>>, vector<1x1x8x16xbf16>
      %38 = vector.shape_cast %37 : vector<1x1x8x16xbf16> to vector<8x16xbf16>
      %cst_31 = arith.constant dense<0.000000e+00> : vector<8x256xf32>
      %39 = tpu.matmul %38, %12, %cst_31 {dimension_numbers = #tpu.dot_dimension_numbers<[1], [0], [0], [1], [0, 0, 1, 1], [], []>} : vector<8x16xbf16>, vector<16x256xbf16>, vector<8x256xf32> -> vector<8x256xf32>
      %c0_32 = arith.constant 0 : index
      %c0_33 = arith.constant 0 : index
      %c0_34 = arith.constant 0 : index
      %40 = vector.load %arg7[%c0_32, %c0_33, %c0_34] : memref<2x8x1xf32, #tpu.memory_space<vmem>>, vector<1x8x1xf32>
      %41 = vector.shape_cast %40 : vector<1x8x1xf32> to vector<8x1xf32>
      %cst_35 = arith.constant dense<0.000000e+00> : vector<8xf32>
      %42 = vector.multi_reduction <add>, %39, %cst_35 [1] : vector<8x256xf32> to vector<8xf32>
      %43 = vector.shape_cast %42 : vector<8xf32> to vector<8x1xf32>
      %44 = arith.addf %41, %43 : vector<8x1xf32>
      %c0_36 = arith.constant 0 : index
      %c0_37 = arith.constant 0 : index
      %c0_38 = arith.constant 0 : index
      %45 = vector.load %arg7[%c0_36, %c0_37, %c0_38] : memref<2x8x1xf32, #tpu.memory_space<vmem>>, vector<1x8x1xf32>
      %46 = vector.shape_cast %45 : vector<1x8x1xf32> to vector<8x1xf32>
      %47 = vector.shape_cast %44 : vector<8x1xf32> to vector<1x8x1xf32>
      tpu.vector_store %arg7[%c0_36, %c0_37, %c0_38], %47 {strides = array<i32>} : memref<2x8x1xf32, #tpu.memory_space<vmem>>, vector<1x8x1xf32>,
      %c1_39 = arith.constant 1 : index
      %c0_40 = arith.constant 0 : index
      %c0_41 = arith.constant 0 : index
      %48 = vector.load %arg7[%c1_39, %c0_40, %c0_41] : memref<2x8x1xf32, #tpu.memory_space<vmem>>, vector<1x8x1xf32>
      %49 = vector.shape_cast %48 : vector<1x8x1xf32> to vector<8x1xf32>
      %50 = arith.mulf %39, %39 : vector<8x256xf32>
      %cst_42 = arith.constant dense<0.000000e+00> : vector<8xf32>
      %51 = vector.multi_reduction <add>, %50, %cst_42 [1] : vector<8x256xf32> to vector<8xf32>
      %52 = vector.shape_cast %51 : vector<8xf32> to vector<8x1xf32>
      %53 = arith.addf %49, %52 : vector<8x1xf32>
      %c1_43 = arith.constant 1 : index
      %c0_44 = arith.constant 0 : index
      %c0_45 = arith.constant 0 : index
      %54 = vector.load %arg7[%c1_43, %c0_44, %c0_45] : memref<2x8x1xf32, #tpu.memory_space<vmem>>, vector<1x8x1xf32>
      %55 = vector.shape_cast %54 : vector<1x8x1xf32> to vector<8x1xf32>
      %56 = vector.shape_cast %53 : vector<8x1xf32> to vector<1x8x1xf32>
      tpu.vector_store %arg7[%c1_43, %c0_44, %c0_45], %56 {strides = array<i32>} : memref<2x8x1xf32, #tpu.memory_space<vmem>>, vector<1x8x1xf32>,
      %57 = arith.index_cast %arg3 : i32 to index
      %c1_46 = arith.constant 1 : index
      %c0_47 = arith.constant 0 : index
      %c0_48 = arith.constant 0 : index
      %58 = vector.load %arg8[%57, %c1_46, %c0_47, %c0_48] : memref<1x4x8x256xf32, #tpu.memory_space<vmem>>, vector<1x1x8x256xf32>
      %59 = vector.shape_cast %58 : vector<1x1x8x256xf32> to vector<8x256xf32>
      %60 = vector.shape_cast %39 : vector<8x256xf32> to vector<1x1x8x256xf32>
      tpu.vector_store %arg8[%57, %c1_46, %c0_47, %c0_48], %60 {strides = array<i32>} : memref<1x4x8x256xf32, #tpu.memory_space<vmem>>, vector<1x1x8x256xf32>,
      %c0_49 = arith.constant 0 : index
      %c2 = arith.constant 2 : index
      %c0_50 = arith.constant 0 : index
      %c0_51 = arith.constant 0 : index
      %61 = vector.load %arg5[%c0_49, %c2, %c0_50, %c0_51] : memref<1x4x8x16xbf16, #tpu.memory_space<vmem>>, vector<1x1x8x16xbf16>
      %62 = vector.shape_cast %61 : vector<1x1x8x16xbf16> to vector<8x16xbf16>
      %cst_52 = arith.constant dense<0.000000e+00> : vector<8x256xf32>
      %63 = tpu.matmul %62, %12, %cst_52 {dimension_numbers = #tpu.dot_dimension_numbers<[1], [0], [0], [1], [0, 0, 1, 1], [], []>} : vector<8x16xbf16>, vector<16x256xbf16>, vector<8x256xf32> -> vector<8x256xf32>
      %c0_53 = arith.constant 0 : index
      %c0_54 = arith.constant 0 : index
      %c0_55 = arith.constant 0 : index
      %64 = vector.load %arg7[%c0_53, %c0_54, %c0_55] : memref<2x8x1xf32, #tpu.memory_space<vmem>>, vector<1x8x1xf32>
      %65 = vector.shape_cast %64 : vector<1x8x1xf32> to vector<8x1xf32>
      %cst_56 = arith.constant dense<0.000000e+00> : vector<8xf32>
      %66 = vector.multi_reduction <add>, %63, %cst_56 [1] : vector<8x256xf32> to vector<8xf32>
      %67 = vector.shape_cast %66 : vector<8xf32> to vector<8x1xf32>
      %68 = arith.addf %65, %67 : vector<8x1xf32>
      %c0_57 = arith.constant 0 : index
      %c0_58 = arith.constant 0 : index
      %c0_59 = arith.constant 0 : index
      %69 = vector.load %arg7[%c0_57, %c0_58, %c0_59] : memref<2x8x1xf32, #tpu.memory_space<vmem>>, vector<1x8x1xf32>
      %70 = vector.shape_cast %69 : vector<1x8x1xf32> to vector<8x1xf32>
      %71 = vector.shape_cast %68 : vector<8x1xf32> to vector<1x8x1xf32>
      tpu.vector_store %arg7[%c0_57, %c0_58, %c0_59], %71 {strides = array<i32>} : memref<2x8x1xf32, #tpu.memory_space<vmem>>, vector<1x8x1xf32>,
      %c1_60 = arith.constant 1 : index
      %c0_61 = arith.constant 0 : index
      %c0_62 = arith.constant 0 : index
      %72 = vector.load %arg7[%c1_60, %c0_61, %c0_62] : memref<2x8x1xf32, #tpu.memory_space<vmem>>, vector<1x8x1xf32>
      %73 = vector.shape_cast %72 : vector<1x8x1xf32> to vector<8x1xf32>
      %74 = arith.mulf %63, %63 : vector<8x256xf32>
      %cst_63 = arith.constant dense<0.000000e+00> : vector<8xf32>
      %75 = vector.multi_reduction <add>, %74, %cst_63 [1] : vector<8x256xf32> to vector<8xf32>
      %76 = vector.shape_cast %75 : vector<8xf32> to vector<8x1xf32>
      %77 = arith.addf %73, %76 : vector<8x1xf32>
      %c1_64 = arith.constant 1 : index
      %c0_65 = arith.constant 0 : index
      %c0_66 = arith.constant 0 : index
      %78 = vector.load %arg7[%c1_64, %c0_65, %c0_66] : memref<2x8x1xf32, #tpu.memory_space<vmem>>, vector<1x8x1xf32>
      %79 = vector.shape_cast %78 : vector<1x8x1xf32> to vector<8x1xf32>
      %80 = vector.shape_cast %77 : vector<8x1xf32> to vector<1x8x1xf32>
      tpu.vector_store %arg7[%c1_64, %c0_65, %c0_66], %80 {strides = array<i32>} : memref<2x8x1xf32, #tpu.memory_space<vmem>>, vector<1x8x1xf32>,
      %81 = arith.index_cast %arg3 : i32 to index
      %c2_67 = arith.constant 2 : index
      %c0_68 = arith.constant 0 : index
      %c0_69 = arith.constant 0 : index
      %82 = vector.load %arg8[%81, %c2_67, %c0_68, %c0_69] : memref<1x4x8x256xf32, #tpu.memory_space<vmem>>, vector<1x1x8x256xf32>
      %83 = vector.shape_cast %82 : vector<1x1x8x256xf32> to vector<8x256xf32>
      %84 = vector.shape_cast %63 : vector<8x256xf32> to vector<1x1x8x256xf32>
      tpu.vector_store %arg8[%81, %c2_67, %c0_68, %c0_69], %84 {strides = array<i32>} : memref<1x4x8x256xf32, #tpu.memory_space<vmem>>, vector<1x1x8x256xf32>,
      %c0_70 = arith.constant 0 : index
      %c3 = arith.constant 3 : index
      %c0_71 = arith.constant 0 : index
      %c0_72 = arith.constant 0 : index
      %85 = vector.load %arg5[%c0_70, %c3, %c0_71, %c0_72] : memref<1x4x8x16xbf16, #tpu.memory_space<vmem>>, vector<1x1x8x16xbf16>
      %86 = vector.shape_cast %85 : vector<1x1x8x16xbf16> to vector<8x16xbf16>
      %cst_73 = arith.constant dense<0.000000e+00> : vector<8x256xf32>
      %87 = tpu.matmul %86, %12, %cst_73 {dimension_numbers = #tpu.dot_dimension_numbers<[1], [0], [0], [1], [0, 0, 1, 1], [], []>} : vector<8x16xbf16>, vector<16x256xbf16>, vector<8x256xf32> -> vector<8x256xf32>
      %c0_74 = arith.constant 0 : index
      %c0_75 = arith.constant 0 : index
      %c0_76 = arith.constant 0 : index
      %88 = vector.load %arg7[%c0_74, %c0_75, %c0_76] : memref<2x8x1xf32, #tpu.memory_space<vmem>>, vector<1x8x1xf32>
      %89 = vector.shape_cast %88 : vector<1x8x1xf32> to vector<8x1xf32>
      %cst_77 = arith.constant dense<0.000000e+00> : vector<8xf32>
      %90 = vector.multi_reduction <add>, %87, %cst_77 [1] : vector<8x256xf32> to vector<8xf32>
      %91 = vector.shape_cast %90 : vector<8xf32> to vector<8x1xf32>
      %92 = arith.addf %89, %91 : vector<8x1xf32>
      %c0_78 = arith.constant 0 : index
      %c0_79 = arith.constant 0 : index
      %c0_80 = arith.constant 0 : index
      %93 = vector.load %arg7[%c0_78, %c0_79, %c0_80] : memref<2x8x1xf32, #tpu.memory_space<vmem>>, vector<1x8x1xf32>
      %94 = vector.shape_cast %93 : vector<1x8x1xf32> to vector<8x1xf32>
      %95 = vector.shape_cast %92 : vector<8x1xf32> to vector<1x8x1xf32>
      tpu.vector_store %arg7[%c0_78, %c0_79, %c0_80], %95 {strides = array<i32>} : memref<2x8x1xf32, #tpu.memory_space<vmem>>, vector<1x8x1xf32>,
      %c1_81 = arith.constant 1 : index
      %c0_82 = arith.constant 0 : index
      %c0_83 = arith.constant 0 : index
      %96 = vector.load %arg7[%c1_81, %c0_82, %c0_83] : memref<2x8x1xf32, #tpu.memory_space<vmem>>, vector<1x8x1xf32>
      %97 = vector.shape_cast %96 : vector<1x8x1xf32> to vector<8x1xf32>
      %98 = arith.mulf %87, %87 : vector<8x256xf32>
      %cst_84 = arith.constant dense<0.000000e+00> : vector<8xf32>
      %99 = vector.multi_reduction <add>, %98, %cst_84 [1] : vector<8x256xf32> to vector<8xf32>
      %100 = vector.shape_cast %99 : vector<8xf32> to vector<8x1xf32>
      %101 = arith.addf %97, %100 : vector<8x1xf32>
      %c1_85 = arith.constant 1 : index
      %c0_86 = arith.constant 0 : index
      %c0_87 = arith.constant 0 : index
      %102 = vector.load %arg7[%c1_85, %c0_86, %c0_87] : memref<2x8x1xf32, #tpu.memory_space<vmem>>, vector<1x8x1xf32>
      %103 = vector.shape_cast %102 : vector<1x8x1xf32> to vector<8x1xf32>
      %104 = vector.shape_cast %101 : vector<8x1xf32> to vector<1x8x1xf32>
      tpu.vector_store %arg7[%c1_85, %c0_86, %c0_87], %104 {strides = array<i32>} : memref<2x8x1xf32, #tpu.memory_space<vmem>>, vector<1x8x1xf32>,
      %105 = arith.index_cast %arg3 : i32 to index
      %c3_88 = arith.constant 3 : index
      %c0_89 = arith.constant 0 : index
      %c0_90 = arith.constant 0 : index
      %106 = vector.load %arg8[%105, %c3_88, %c0_89, %c0_90] : memref<1x4x8x256xf32, #tpu.memory_space<vmem>>, vector<1x1x8x256xf32>
      %107 = vector.shape_cast %106 : vector<1x1x8x256xf32> to vector<8x256xf32>
      %108 = vector.shape_cast %87 : vector<8x256xf32> to vector<1x1x8x256xf32>
      tpu.vector_store %arg8[%105, %c3_88, %c0_89, %c0_90], %108 {strides = array<i32>} : memref<1x4x8x256xf32, #tpu.memory_space<vmem>>, vector<1x1x8x256xf32>,
    } else {
    }
    %c1_i32 = arith.constant 1 : i32
    %8 = arith.cmpi eq, %arg2, %c1_i32 : i32
    %9 = arith.extui %8 : i1 to i32
    %c0_i32_4 = arith.constant 0 : i32
    %10 = arith.cmpi ne, %9, %c0_i32_4 : i32
    scf.if %10 {
      %c0 = arith.constant 0 : index
      %c0_5 = arith.constant 0 : index
      %c0_6 = arith.constant 0 : index
      %11 = vector.load %arg7[%c0, %c0_5, %c0_6] : memref<2x8x1xf32, #tpu.memory_space<vmem>>, vector<1x8x1xf32>
      %12 = vector.shape_cast %11 : vector<1x8x1xf32> to vector<8x1xf32>
      %cst = arith.constant 9.765625E-4 : f32
      %13 = vector.broadcast %cst : f32 to vector<8x1xf32>
      %14 = arith.mulf %12, %13 : vector<8x1xf32>
      %c1 = arith.constant 1 : index
      %c0_7 = arith.constant 0 : index
      %c0_8 = arith.constant 0 : index
      %15 = vector.load %arg7[%c1, %c0_7, %c0_8] : memref<2x8x1xf32, #tpu.memory_space<vmem>>, vector<1x8x1xf32>
      %16 = vector.shape_cast %15 : vector<1x8x1xf32> to vector<8x1xf32>
      %cst_9 = arith.constant 9.765625E-4 : f32
      %17 = vector.broadcast %cst_9 : f32 to vector<8x1xf32>
      %18 = arith.mulf %16, %17 : vector<8x1xf32>
      %19 = arith.mulf %14, %14 : vector<8x1xf32>
      %20 = arith.subf %18, %19 : vector<8x1xf32>
      %cst_10 = arith.constant 9.99999974E-6 : f32
      %21 = vector.broadcast %cst_10 : f32 to vector<8x1xf32>
      %22 = arith.addf %20, %21 : vector<8x1xf32>
      %23 = math.rsqrt %22 : vector<8x1xf32>
      %24 = arith.index_cast %arg3 : i32 to index
      %c0_11 = arith.constant 0 : index
      %c0_12 = arith.constant 0 : index
      %c0_13 = arith.constant 0 : index
      %25 = vector.load %arg8[%24, %c0_11, %c0_12, %c0_13] : memref<1x4x8x256xf32, #tpu.memory_space<vmem>>, vector<1x1x8x256xf32>
      %26 = vector.shape_cast %25 : vector<1x1x8x256xf32> to vector<8x256xf32>
      %27 = vector.broadcast %14 : vector<8x1xf32> to vector<8x256xf32>
      %28 = arith.subf %26, %27 : vector<8x256xf32>
      %29 = vector.broadcast %23 : vector<8x1xf32> to vector<8x256xf32>
      %30 = arith.mulf %28, %29 : vector<8x256xf32>
      %cst_14 = arith.constant 0.000000e+00 : f32
      %31 = vector.broadcast %cst_14 : f32 to vector<8x256xf32>
      %32 = arith.maximumf %30, %31 : vector<8x256xf32>
      %c0_15 = arith.constant 0 : index
      %c0_16 = arith.constant 0 : index
      %c0_17 = arith.constant 0 : index
      %c0_18 = arith.constant 0 : index
      %c0_19 = arith.constant 0 : index
      %33 = vector.load %arg6[%c0_15, %c0_16, %c0_17, %c0_18, %c0_19] : memref<1x1x4x8x256xf32, #tpu.memory_space<vmem>>, vector<1x1x1x8x256xf32>
      %34 = vector.shape_cast %33 : vector<1x1x1x8x256xf32> to vector<8x256xf32>
      %35 = vector.shape_cast %32 : vector<8x256xf32> to vector<1x1x1x8x256xf32>
      tpu.vector_store %arg6[%c0_15, %c0_16, %c0_17, %c0_18, %c0_19], %35 {strides = array<i32>} : memref<1x1x4x8x256xf32, #tpu.memory_space<vmem>>, vector<1x1x1x8x256xf32>,
      %36 = arith.index_cast %arg3 : i32 to index
      %c1_20 = arith.constant 1 : index
      %c0_21 = arith.constant 0 : index
      %c0_22 = arith.constant 0 : index
      %37 = vector.load %arg8[%36, %c1_20, %c0_21, %c0_22] : memref<1x4x8x256xf32, #tpu.memory_space<vmem>>, vector<1x1x8x256xf32>
      %38 = vector.shape_cast %37 : vector<1x1x8x256xf32> to vector<8x256xf32>
      %39 = vector.broadcast %14 : vector<8x1xf32> to vector<8x256xf32>
      %40 = arith.subf %38, %39 : vector<8x256xf32>
      %41 = vector.broadcast %23 : vector<8x1xf32> to vector<8x256xf32>
      %42 = arith.mulf %40, %41 : vector<8x256xf32>
      %cst_23 = arith.constant 0.000000e+00 : f32
      %43 = vector.broadcast %cst_23 : f32 to vector<8x256xf32>
      %44 = arith.maximumf %42, %43 : vector<8x256xf32>
      %c0_24 = arith.constant 0 : index
      %c0_25 = arith.constant 0 : index
      %c1_26 = arith.constant 1 : index
      %c0_27 = arith.constant 0 : index
      %c0_28 = arith.constant 0 : index
      %45 = vector.load %arg6[%c0_24, %c0_25, %c1_26, %c0_27, %c0_28] : memref<1x1x4x8x256xf32, #tpu.memory_space<vmem>>, vector<1x1x1x8x256xf32>
      %46 = vector.shape_cast %45 : vector<1x1x1x8x256xf32> to vector<8x256xf32>
      %47 = vector.shape_cast %44 : vector<8x256xf32> to vector<1x1x1x8x256xf32>
      tpu.vector_store %arg6[%c0_24, %c0_25, %c1_26, %c0_27, %c0_28], %47 {strides = array<i32>} : memref<1x1x4x8x256xf32, #tpu.memory_space<vmem>>, vector<1x1x1x8x256xf32>,
      %48 = arith.index_cast %arg3 : i32 to index
      %c2 = arith.constant 2 : index
      %c0_29 = arith.constant 0 : index
      %c0_30 = arith.constant 0 : index
      %49 = vector.load %arg8[%48, %c2, %c0_29, %c0_30] : memref<1x4x8x256xf32, #tpu.memory_space<vmem>>, vector<1x1x8x256xf32>
      %50 = vector.shape_cast %49 : vector<1x1x8x256xf32> to vector<8x256xf32>
      %51 = vector.broadcast %14 : vector<8x1xf32> to vector<8x256xf32>
      %52 = arith.subf %50, %51 : vector<8x256xf32>
      %53 = vector.broadcast %23 : vector<8x1xf32> to vector<8x256xf32>
      %54 = arith.mulf %52, %53 : vector<8x256xf32>
      %cst_31 = arith.constant 0.000000e+00 : f32
      %55 = vector.broadcast %cst_31 : f32 to vector<8x256xf32>
      %56 = arith.maximumf %54, %55 : vector<8x256xf32>
      %c0_32 = arith.constant 0 : index
      %c0_33 = arith.constant 0 : index
      %c2_34 = arith.constant 2 : index
      %c0_35 = arith.constant 0 : index
      %c0_36 = arith.constant 0 : index
      %57 = vector.load %arg6[%c0_32, %c0_33, %c2_34, %c0_35, %c0_36] : memref<1x1x4x8x256xf32, #tpu.memory_space<vmem>>, vector<1x1x1x8x256xf32>
      %58 = vector.shape_cast %57 : vector<1x1x1x8x256xf32> to vector<8x256xf32>
      %59 = vector.shape_cast %56 : vector<8x256xf32> to vector<1x1x1x8x256xf32>
      tpu.vector_store %arg6[%c0_32, %c0_33, %c2_34, %c0_35, %c0_36], %59 {strides = array<i32>} : memref<1x1x4x8x256xf32, #tpu.memory_space<vmem>>, vector<1x1x1x8x256xf32>,
      %60 = arith.index_cast %arg3 : i32 to index
      %c3 = arith.constant 3 : index
      %c0_37 = arith.constant 0 : index
      %c0_38 = arith.constant 0 : index
      %61 = vector.load %arg8[%60, %c3, %c0_37, %c0_38] : memref<1x4x8x256xf32, #tpu.memory_space<vmem>>, vector<1x1x8x256xf32>
      %62 = vector.shape_cast %61 : vector<1x1x8x256xf32> to vector<8x256xf32>
      %63 = vector.broadcast %14 : vector<8x1xf32> to vector<8x256xf32>
      %64 = arith.subf %62, %63 : vector<8x256xf32>
      %65 = vector.broadcast %23 : vector<8x1xf32> to vector<8x256xf32>
      %66 = arith.mulf %64, %65 : vector<8x256xf32>
      %cst_39 = arith.constant 0.000000e+00 : f32
      %67 = vector.broadcast %cst_39 : f32 to vector<8x256xf32>
      %68 = arith.maximumf %66, %67 : vector<8x256xf32>
      %c0_40 = arith.constant 0 : index
      %c0_41 = arith.constant 0 : index
      %c3_42 = arith.constant 3 : index
      %c0_43 = arith.constant 0 : index
      %c0_44 = arith.constant 0 : index
      %69 = vector.load %arg6[%c0_40, %c0_41, %c3_42, %c0_43, %c0_44] : memref<1x1x4x8x256xf32, #tpu.memory_space<vmem>>, vector<1x1x1x8x256xf32>
      %70 = vector.shape_cast %69 : vector<1x1x1x8x256xf32> to vector<8x256xf32>
      %71 = vector.shape_cast %68 : vector<8x256xf32> to vector<1x1x1x8x256xf32>
      tpu.vector_store %arg6[%c0_40, %c0_41, %c3_42, %c0_43, %c0_44], %71 {strides = array<i32>} : memref<1x1x4x8x256xf32, #tpu.memory_space<vmem>>, vector<1x1x1x8x256xf32>,
    } else {
    }
    return
  }
  func.func @transform_0(%arg0: i32, %arg1: i32, %arg2: i32, %arg3: i32) -> (i32, i32, i32) {
    %c1_i32 = arith.constant 1 : i32
    %0 = arith.subi %c1_i32, %arg2 : i32
    %1 = arith.muli %arg3, %0 : i32
    %c0_i32 = arith.constant 0 : i32
    %c0_i32_0 = arith.constant 0 : i32
    return %arg0, %c0_i32, %1 : i32, i32, i32
  }
  func.func @transform_1(%arg0: i32, %arg1: i32, %arg2: i32, %arg3: i32) -> (i32, i32, i32, i32) {
    %c0_i32 = arith.constant 0 : i32
    %c0_i32_0 = arith.constant 0 : i32
    %c0_i32_1 = arith.constant 0 : i32
    %c0_i32_2 = arith.constant 0 : i32
    return %arg1, %c0_i32, %c0_i32_0, %c0_i32_1 : i32, i32, i32, i32
  }
  func.func @transform_2(%arg0: i32, %arg1: i32, %arg2: i32, %arg3: i32) -> (i32, i32, i32, i32, i32) {
    %0 = arith.muli %arg3, %arg2 : i32
    %c0_i32 = arith.constant 0 : i32
    %c0_i32_0 = arith.constant 0 : i32
    %c0_i32_1 = arith.constant 0 : i32
    return %arg0, %arg1, %c0_i32, %c0_i32_0, %0 : i32, i32, i32, i32, i32
  }
}

</mosaic_0001>

<llo_original>
// kernel: tpu_custom_call.1
$region0: #{tpu_custom_call.1}
  #allocation0 [shape = 'u32[]', space=smem, size = 0x4, offset = 0x4, fixed_abs, tag = 'smem constant byte address 0x4 - core index']
  #allocation1 [shape = 'u32[72,128]{1,0:T(1,128)}', space=vmem, size = 0x9000, scoped, tag = 'internal scratch']
  #allocation2 [shape = 'f32[2,8,1]{2,1,0:T(8,128)}', space=vmem, size = 0x2000, scoped, tag = 'scratch operand']
  #allocation3 [shape = 'f32[1,4,8,256]{3,2,1,0:T(8,128)}', space=vmem, size = 0x8000, scoped, tag = 'scratch operand']
  %s0 = inlined_call_operand.hbm [shape: bf16[2,16,256], index: 0, kind: input, shape index: {}]
  %s1 = inlined_call_operand.hbm [shape: bf16[1,4,8,16], index: 1, kind: input, shape index: {}]
  %s2 = inlined_call_operand.hbm [shape: f32[2,1,4,8,256], index: 2, kind: output, shape index: {}]
  %s3 = sld [smem:[#allocation0]]
  $region61: #{tpu_custom_call.1} parent=0
    _
  %s5 = ssub.s32 1, %s3
  %s6 = scalar_select 0, %s5, %s3
  $region1: #{tpu_custom_call.1} parent=0
    #allocation4 [shape = 'u8[16384]{0}', space=vmem, size = 0x4000, scoped, tag = 'input window, operand 0']
    #allocation5 [shape = 's32[2]{0}', space=sflag, size = 0x8, scoped, tag = 'scoped memory for tpu_custom_call.1']
    #allocation6 [shape = 's32[2]{0}', space=sflag, size = 0x8, scoped, tag = 'scoped memory for tpu_custom_call.1']
    #allocation7 [shape = 'u8[8192]{0}', space=vmem, size = 0x2000, scoped, tag = 'input window, operand 1, single buffered']
    #allocation8 [shape = 's32[1]{0}', space=sflag, size = 0x4, scoped, tag = 'scoped memory for tpu_custom_call.1']
    #allocation9 [shape = 'u8[65536]{0}', space=vmem, size = 0x10000, scoped, tag = 'output window, operand 0']
    %7 = vsyncpa [#allocation5], 0
    %s8 = scalar_lea.sflag [#allocation5], 1
    %9 = vsyncpa %s8, 0
    %10 = vsyncpa [#allocation8], 0
    %11 = vsyncpa [#allocation6], 0
    %s12 = scalar_lea.sflag [#allocation6], 1
    %13 = vsyncpa %s12, 0
    loop: start=0, step=1, limit=6
    $region2: #{tpu_custom_call.1} parent=1 // loop_pre_header
      _
    $region3: #{tpu_custom_call.1} parent=1 // loop_header
      %s15 = sphi 0, %s19
      %p16 = scmp.ge.s32.totalorder %s15, 6
      %s22 = sphi 0, %s48
      %s23 = sphi 0, %s44
      %s24 = sphi 0, %s40
      %s25 = sphi 0, %s36
      %s26 = sphi 0, %s22
      %s27 = sphi 0, %s23
      %s28 = sphi 0, %s24
      %s29 = sphi 0, %s25
      %s30 = sphi 0, %s26
      %s31 = sphi 0, %s27
      %s32 = sphi 0, %s28
      %s33 = sphi 0, %s29
      %s57 = sphi 0, %s59
      %s60 = sphi 0, %s57
      %s61 = sphi 0, %s60
      %s77 = sphi 0, %s61
      %s83 = sphi 0, %s85
      %s86 = sphi 0, %s83
      %s87 = sphi 0, %s86
      %s103 = sphi 0, %s87
      %s115 = sphi 0, %s117
      %s118 = sphi 0, %s115
      %s119 = sphi 0, %s118
      %s135 = sphi 0, %s119
    $region4: #{tpu_custom_call.1} parent=1 // loop_header_branch
      %18 = sbr.rel (%p16) target = $region8
    $region5: #{tpu_custom_call.1} parent=1 // loop_body
      %s20 = ssub.s32 %s15, 1
      %s21 = ssub.s32 %s15, 2
      %s34 = sadd.s32 1, %s25
      %p35 = scmp.ge.s32.totalorder %s34, 1
      %s36 = scalar_select %p35, 0, %s34
      %s37 = sadd.s32 1, %s24
      %s38 = scalar_select %p35, %s37, %s24
      %p39 = scmp.ge.s32.totalorder %s38, 2
      %s40 = scalar_select %p39, 0, %s38
      %s41 = sadd.s32 1, %s23
      %s42 = scalar_select %p39, %s41, %s23
      %p43 = scmp.ge.s32.totalorder %s42, 1
      %s44 = scalar_select %p43, 0, %s42
      %s45 = sadd.s32 1, %s22
      %s46 = scalar_select %p43, %s45, %s22
      %p47 = scmp.ge.s32.totalorder %s46, 2
      %s48 = scalar_select %p47, 0, %s46
      %s49 = ssub.s32 1, %s24
      %s50 = smul.u32 %s25, %s49
      %s51 = ssub.s32 1, %s40
      %s52 = smul.u32 %s36, %s51
      %s53 = ssub.s32 %s22, %s48
      %s54 = ssub.s32 %s50, %s52
      %s55 = sor.u32 %s53, %s54
      %p56 = scmp.eq.s32.totalorder %s55, 0
      %s58 = sadd.s32 %s57, 1
      %s59 = scalar_select %p56, %s57, %s58
      %p62 = pneg %p56
      %p63 = scmp.eq.s32.totalorder %s15, 3
      %p64 = por %p62, %p63
      %p65 = scmp.ne.s32.totalorder %s57, %s60
      %p66 = scmp.eq.s32.totalorder %s15, 0
      %p67 = por %p65, %p66
      %p68 = scmp.ne.s32.totalorder %s57, %s60
      %p69 = scmp.eq.s32.totalorder %s20, 3
      %p70 = por %p68, %p69
      %p71 = scmp.ne.s32.totalorder %s60, %s61
      %p72 = scmp.eq.s32.totalorder %s20, 0
      %p73 = por %p71, %p72
      %p74 = scmp.ne.s32.totalorder %s60, %s61
      %p75 = scmp.eq.s32.totalorder %s21, 3
      %p76 = por %p74, %p75
      %p78 = scmp.ne.s32.totalorder %s61, %s77
      %p79 = scmp.eq.s32.totalorder %s21, 0
      %p80 = por %p78, %p79
      %s81 = ssub.s32 %s23, %s44
      %p82 = scmp.eq.s32.totalorder %s81, 0
      %s84 = sadd.s32 %s83, 1
      %s85 = scalar_select %p82, %s83, %s84
      %p88 = pneg %p82
      %p89 = scmp.eq.s32.totalorder %s15, 3
      %p90 = por %p88, %p89
      %p91 = scmp.ne.s32.totalorder %s83, %s86
      %p92 = scmp.eq.s32.totalorder %s15, 0
      %p93 = por %p91, %p92
      %p94 = scmp.ne.s32.totalorder %s83, %s86
      %p95 = scmp.eq.s32.totalorder %s20, 3
      %p96 = por %p94, %p95
      %p97 = scmp.ne.s32.totalorder %s86, %s87
      %p98 = scmp.eq.s32.totalorder %s20, 0
      %p99 = por %p97, %p98
      %p100 = scmp.ne.s32.totalorder %s86, %s87
      %p101 = scmp.eq.s32.totalorder %s21, 3
      %p102 = por %p100, %p101
      %p104 = scmp.ne.s32.totalorder %s87, %s103
      %p105 = scmp.eq.s32.totalorder %s21, 0
      %p106 = por %p104, %p105
      %s107 = smul.u32 %s25, %s24
      %s108 = smul.u32 %s36, %s40
      %s109 = ssub.s32 %s22, %s48
      %s110 = ssub.s32 %s23, %s44
      %s111 = sor.u32 %s109, %s110
      %s112 = ssub.s32 %s107, %s108
      %s113 = sor.u32 %s111, %s112
      %p114 = scmp.eq.s32.totalorder %s113, 0
      %s116 = sadd.s32 %s115, 1
      %s117 = scalar_select %p114, %s115, %s116
      %p120 = pneg %p114
      %p121 = scmp.eq.s32.totalorder %s15, 3
      %p122 = por %p120, %p121
      %p123 = scmp.ne.s32.totalorder %s115, %s118
      %p124 = scmp.eq.s32.totalorder %s15, 0
      %p125 = por %p123, %p124
      %p126 = scmp.ne.s32.totalorder %s115, %s118
      %p127 = scmp.eq.s32.totalorder %s20, 3
      %p128 = por %p126, %p127
      %p129 = scmp.ne.s32.totalorder %s118, %s119
      %p130 = scmp.eq.s32.totalorder %s20, 0
      %p131 = por %p129, %p130
      %p132 = scmp.ne.s32.totalorder %s118, %s119
      %p133 = scmp.eq.s32.totalorder %s21, 3
      %p134 = por %p132, %p133
      %p136 = scmp.ne.s32.totalorder %s119, %s135
      %p137 = scmp.eq.s32.totalorder %s21, 0
      %p138 = por %p136, %p137
      %p139 = scmp.le.s32.totalorder 1, %s15
      %p140 = scmp.lt.s32.totalorder %s15, 5
      %p141 = pnand %p139, %p140
      %p142 = pneg %p141
      // Predicated region
      $region9: #{tpu_custom_call.1} parent=5 // pred_check
        _
      $region10: #{tpu_custom_call.1} parent=5 // pred_check_branch
        %144 = sbr.rel (%p141) target = $region12
      $region11: #{tpu_custom_call.1} parent=5 // pred_region
        %s145 = ssub.s32 %s15, 1
        // Predicated region
        $region13: #{tpu_custom_call.1} parent=11 // pred_check
          %p146 = pneg %p99
        $region14: #{tpu_custom_call.1} parent=11 // pred_check_branch
          %148 = sbr.rel (%p146) target = $region16
        $region15: #{tpu_custom_call.1} parent=11 // pred_region
          %150 = vsyncadd [#allocation8], 0
          %s151 = smul.addr %s27, 4
          %s152 = smul.addr %s151, 4
          %s153 = scalar_lea.hbm %s1, %s152
          %s154 = sshll.u32 %s153, 4
          %s155 = int_to_ptr.hbm [resolvable:$true] %s154
          %s156 = sshll.u32 [#allocation7], 4
          %s157 = int_to_ptr.vmem [resolvable:$true] %s156
          %162 = dma.hbm_to_vmem [thread:$0]  %s155, 256, %s157, [#allocation8], 64, 64, 4
        $region16: #{tpu_custom_call.1} parent=11 // pred_fallthru
          _
      $region12: #{tpu_custom_call.1} parent=5 // pred_fallthru
        _
      %p163 = scmp.lt.s32.totalorder %s15, 4
      // Predicated region
      $region17: #{tpu_custom_call.1} parent=5 // pred_check
        %p164 = pneg %p163
      $region18: #{tpu_custom_call.1} parent=5 // pred_check_branch
        %166 = sbr.rel (%p164) target = $region20
      $region19: #{tpu_custom_call.1} parent=5 // pred_region
        // Predicated region
        $region21: #{tpu_custom_call.1} parent=19 // pred_check
          %p167 = pneg %p67
        $region22: #{tpu_custom_call.1} parent=19 // pred_check_branch
          %169 = sbr.rel (%p167) target = $region24
        $region23: #{tpu_custom_call.1} parent=19 // pred_region
          %s170 = sand.u32 %s57, 1
          %s171 = scalar_lea.sflag [#allocation5], %s170
          %s172 = sand.u32 %s57, 1
          %s173 = smul.addr %s172, 16
          %s174 = scalar_lea.vmem [#allocation4], %s173
          %s175 = ssub.s32 1, %s24
          %s176 = smul.u32 %s25, %s175
          %s177 = smul.u32 2, %s176
          %179 = vsyncadd %s171, 0
          %s180 = smul.addr %s22, 4
          %s181 = sadd.s32 %s177, %s180
          %s182 = smul.addr %s181, 4
          %s183 = scalar_lea.hbm %s0, %s182
          %s184 = sshll.u32 %s183, 4
          %s185 = int_to_ptr.hbm [resolvable:$true] %s184
          %s186 = sshll.u32 %s174, 4
          %s187 = int_to_ptr.vmem [resolvable:$true] %s186
          %192 = dma.hbm_to_vmem [thread:$0]  %s185, 256, %s187, %s171, 128, 128, 8
        $region24: #{tpu_custom_call.1} parent=19 // pred_fallthru
          _
      $region20: #{tpu_custom_call.1} parent=5 // pred_fallthru
        _
      %p193 = scmp.le.s32.totalorder 1, %s15
      %p194 = scmp.lt.s32.totalorder %s15, 5
      %p195 = pnand %p193, %p194
      %p196 = pneg %p195
      // Predicated region
      $region25: #{tpu_custom_call.1} parent=5 // pred_check
        _
      $region26: #{tpu_custom_call.1} parent=5 // pred_check_branch
        %198 = sbr.rel (%p195) target = $region28
      $region27: #{tpu_custom_call.1} parent=5 // pred_region
        %s199 = ssub.s32 %s15, 1
        %s200 = sand.u32 %s60, 1
        %s201 = scalar_lea.sflag [#allocation5], %s200
        %s202 = sand.u32 %s60, 1
        %s203 = smul.addr %s202, 16
        %s204 = scalar_lea.vmem [#allocation4], %s203
        // Predicated region
        $region29: #{tpu_custom_call.1} parent=27 // pred_check
          %p205 = pneg %p73
        $region30: #{tpu_custom_call.1} parent=27 // pred_check_branch
          %207 = sbr.rel (%p205) target = $region32
        $region31: #{tpu_custom_call.1} parent=27 // pred_region
          %209 = dma.done %s201, 256
        $region32: #{tpu_custom_call.1} parent=27 // pred_fallthru
          _
        // Predicated region
        $region33: #{tpu_custom_call.1} parent=27 // pred_check
          %p210 = pneg %p99
        $region34: #{tpu_custom_call.1} parent=27 // pred_check_branch
          %212 = sbr.rel (%p210) target = $region36
        $region35: #{tpu_custom_call.1} parent=27 // pred_region
          %214 = dma.done [#allocation8], 256
        $region36: #{tpu_custom_call.1} parent=27 // pred_fallthru
          _
        %s215 = sand.u32 %s60, 1
        %s216 = scalar_lea.sflag [#allocation5], %s215
        %s217 = sand.u32 %s60, 1
        %s218 = smul.addr %s217, 16
        %s219 = scalar_lea.vmem [#allocation4], %s218
        %p220 = pneg %p73
        %p221 = pneg %p70
        %p222 = pneg %p99
        %p223 = pneg %p96
        %p224 = pneg %p131
        %p225 = pneg %p128
        %s226 = sand.u32 %s118, 1
        %s227 = scalar_lea.sflag [#allocation6], %s226
        %s228 = sand.u32 %s118, 1
        %s229 = smul.addr %s228, 64
        %s230 = scalar_lea.vmem [#allocation9], %s229
        %s231 = ssub.s32 1, %s28
        %s232 = smul.u32 %s29, %s231
        %s233 = smul.u32 2, %s232
        %s234 = smul.u32 %s29, %s28
        %s235 = smul.u32 2, %s234
        %p237 = scmp.eq.s32.totalorder %s28, 0
        %p238 = scmp.eq.s32.totalorder %s29, 0
        %p239 = pnand %p237, %p238
        %p240 = pneg %p239
        // Predicated region
        $region37: #{tpu_custom_call.1} parent=27 // pred_check
          _
        $region38: #{tpu_custom_call.1} parent=27 // pred_check_branch
          %242 = sbr.rel (%p239) target = $region40
        $region39: #{tpu_custom_call.1} parent=27 // pred_region
          %vm243 = vcmask 7168
          %244 = vst.msk [vmem:[#allocation2] sm:$0xff] %vm243, 0.0
          %245 = vst.msk [vmem:[#allocation2 + $0x8] sm:$0xff] %vm243, 0.0
        $region40: #{tpu_custom_call.1} parent=27 // pred_fallthru
          _
        // Predicated region
        $region41: #{tpu_custom_call.1} parent=27 // pred_check
          %p246 = pneg %p237
        $region42: #{tpu_custom_call.1} parent=27 // pred_check_branch
          %248 = sbr.rel (%p246) target = $region44
        $region43: #{tpu_custom_call.1} parent=27 // pred_region
          %v249 = vld [vmem:[%s204] sm:$0xff]
          %v250 = vld [vmem:[%s204 + $0x8] sm:$0xff]
          %v251 = vld [vmem:[#allocation7] sm:$0xf]
          %v254 = vunpack.c.l.b16 %v249
          %v255 = vunpack.c.h.b16 %v249
          %v256 = vunpack.c.l.b16 %v250
          %v257 = vunpack.c.h.b16 %v250
          %v258 = vpack.c.b16 %v256, %v254
          %v259 = vpack.c.b16 %v257, %v255
          %vm262 = vcmask 130048
          %v264 = vsel %vm262, %v251, 0
          %266 = vmatpush.bf16.msra.mxu0 0
          %267 = vmatpush.bf16.msra.mxu0 0
          %268 = vmatpush.bf16.msra.mxu0 0
          %269 = vmatpush.bf16.msra.mxu0 0
          %270 = vmatpush.bf16.msra.mxu0 0
          %271 = vmatpush.bf16.msra.mxu0 0
          %272 = vmatpush.bf16.msra.mxu0 0
          %273 = vmatpush.bf16.msra.mxu0 %v258
          %274 = vmatmul.bf16.gmra.mxu0 %v264
          %v275 = vpop.f32.mrf.mxu0
          %v276 = vadd.f32 0.0, %v275
          %v277 = vpop.f32.mrf.mxu0
          %278 = vdwg.mxu0
          %279 = vmatpush.bf16.msra.mxu0 0
          %280 = vmatpush.bf16.msra.mxu0 0
          %281 = vmatpush.bf16.msra.mxu0 0
          %282 = vmatpush.bf16.msra.mxu0 0
          %283 = vmatpush.bf16.msra.mxu0 0
          %284 = vmatpush.bf16.msra.mxu0 0
          %285 = vmatpush.bf16.msra.mxu0 0
          %286 = vmatpush.bf16.msra.mxu0 %v259
          %287 = vmatmul.bf16.gmra.mxu0 %v264
          %v288 = vpop.f32.mrf.mxu0
          %v289 = vadd.f32 0.0, %v288
          %v290 = vpop.f32.mrf.mxu0
          %291 = vdwg.mxu0
          %v292 = vld [vmem:[#allocation2] sm:$0xff]
          %v293 = vadd.f32 %v276, %v289
          %294 = vadd.xlane.f32.xlu0 %v293
          %v295 = vpop.xlane.xlu0 %294
          %v296 = vadd.f32 %v292, %v295
          %vm297 = vcmask 7168
          %298 = vst.msk [vmem:[#allocation2] sm:$0xff] %vm297, %v296
          %s299 = scalar_lea.vmem [#allocation2], 8
          %v300 = vld [vmem:[%s299] sm:$0xff]
          %v301 = vmul.f32 %v276, %v276
          %v302 = vmul.f32 %v289, %v289
          %v303 = vadd.f32 %v301, %v302
          %304 = vadd.xlane.f32.xlu0 %v303
          %v305 = vpop.xlane.xlu0 %304
          %v306 = vadd.f32 %v300, %v305
          %307 = vst.msk [vmem:[%s299] sm:$0xff] %vm297, %v306
          %s308 = smul.u32 %s29, 8
          %s309 = smul.addr %s308, 8
          %s310 = scalar_lea.vmem [#allocation3], %s309
          %311 = vst [vmem:[%s310] sm:$0xff] %v276
          %312 = vst [vmem:[%s310 + $0x8] sm:$0xff] %v289
          %s313 = scalar_lea.vmem [#allocation7], 4
          %v314 = vld [vmem:[%s313] sm:$0xf]
          %v316 = vsel %vm262, %v314, 0
          %318 = vmatpush.bf16.msra.mxu0 0
          %319 = vmatpush.bf16.msra.mxu0 0
          %320 = vmatpush.bf16.msra.mxu0 0
          %321 = vmatpush.bf16.msra.mxu0 0
          %322 = vmatpush.bf16.msra.mxu0 0
          %323 = vmatpush.bf16.msra.mxu0 0
          %324 = vmatpush.bf16.msra.mxu0 0
          %325 = vmatpush.bf16.msra.mxu0 %v258
          %326 = vmatmul.bf16.gmra.mxu0 %v316
          %v327 = vpop.f32.mrf.mxu0
          %v328 = vadd.f32 0.0, %v327
          %v329 = vpop.f32.mrf.mxu0
          %330 = vdwg.mxu0
          %331 = vmatpush.bf16.msra.mxu0 0
          %332 = vmatpush.bf16.msra.mxu0 0
          %333 = vmatpush.bf16.msra.mxu0 0
          %334 = vmatpush.bf16.msra.mxu0 0
          %335 = vmatpush.bf16.msra.mxu0 0
          %336 = vmatpush.bf16.msra.mxu0 0
          %337 = vmatpush.bf16.msra.mxu0 0
          %338 = vmatpush.bf16.msra.mxu0 %v259
          %339 = vmatmul.bf16.gmra.mxu0 %v316
          %v340 = vpop.f32.mrf.mxu0
          %v341 = vadd.f32 0.0, %v340
          %v342 = vpop.f32.mrf.mxu0
          %343 = vdwg.mxu0
          %v344 = vld [vmem:[#allocation2] sm:$0xff]
          %v345 = vadd.f32 %v328, %v341
          %346 = vadd.xlane.f32.xlu0 %v345
          %v347 = vpop.xlane.xlu0 %346
          %v348 = vadd.f32 %v344, %v347
          %349 = vst.msk [vmem:[#allocation2] sm:$0xff] %vm297, %v348
          %v350 = vld [vmem:[%s299] sm:$0xff]
          %v351 = vmul.f32 %v328, %v328
          %v352 = vmul.f32 %v341, %v341
          %v353 = vadd.f32 %v351, %v352
          %354 = vadd.xlane.f32.xlu0 %v353
          %v355 = vpop.xlane.xlu0 %354
          %v356 = vadd.f32 %v350, %v355
          %357 = vst.msk [vmem:[%s299] sm:$0xff] %vm297, %v356
          %s358 = sadd.s32 2, %s308
          %s359 = smul.addr %s358, 8
          %s360 = scalar_lea.vmem [#allocation3], %s359
          %361 = vst [vmem:[%s360] sm:$0xff] %v328
          %362 = vst [vmem:[%s360 + $0x8] sm:$0xff] %v341
          %s363 = scalar_lea.vmem [#allocation7], 8
          %v364 = vld [vmem:[%s363] sm:$0xf]
          %v366 = vsel %vm262, %v364, 0
          %368 = vmatpush.bf16.msra.mxu0 0
          %369 = vmatpush.bf16.msra.mxu0 0
          %370 = vmatpush.bf16.msra.mxu0 0
          %371 = vmatpush.bf16.msra.mxu0 0
          %372 = vmatpush.bf16.msra.mxu0 0
          %373 = vmatpush.bf16.msra.mxu0 0
          %374 = vmatpush.bf16.msra.mxu0 0
          %375 = vmatpush.bf16.msra.mxu0 %v258
          %376 = vmatmul.bf16.gmra.mxu0 %v366
          %v377 = vpop.f32.mrf.mxu0
          %v378 = vadd.f32 0.0, %v377
          %v379 = vpop.f32.mrf.mxu0
          %380 = vdwg.mxu0
          %381 = vmatpush.bf16.msra.mxu0 0
          %382 = vmatpush.bf16.msra.mxu0 0
          %383 = vmatpush.bf16.msra.mxu0 0
          %384 = vmatpush.bf16.msra.mxu0 0
          %385 = vmatpush.bf16.msra.mxu0 0
          %386 = vmatpush.bf16.msra.mxu0 0
          %387 = vmatpush.bf16.msra.mxu0 0
          %388 = vmatpush.bf16.msra.mxu0 %v259
          %389 = vmatmul.bf16.gmra.mxu0 %v366
          %v390 = vpop.f32.mrf.mxu0
          %v391 = vadd.f32 0.0, %v390
          %v392 = vpop.f32.mrf.mxu0
          %393 = vdwg.mxu0
          %v394 = vld [vmem:[#allocation2] sm:$0xff]
          %v395 = vadd.f32 %v378, %v391
          %396 = vadd.xlane.f32.xlu0 %v395
          %v397 = vpop.xlane.xlu0 %396
          %v398 = vadd.f32 %v394, %v397
          %399 = vst.msk [vmem:[#allocation2] sm:$0xff] %vm297, %v398
          %v400 = vld [vmem:[%s299] sm:$0xff]
          %v401 = vmul.f32 %v378, %v378
          %v402 = vmul.f32 %v391, %v391
          %v403 = vadd.f32 %v401, %v402
          %404 = vadd.xlane.f32.xlu0 %v403
          %v405 = vpop.xlane.xlu0 %404
          %v406 = vadd.f32 %v400, %v405
          %407 = vst.msk [vmem:[%s299] sm:$0xff] %vm297, %v406
          %s408 = sadd.s32 4, %s308
          %s409 = smul.addr %s408, 8
          %s410 = scalar_lea.vmem [#allocation3], %s409
          %411 = vst [vmem:[%s410] sm:$0xff] %v378
          %412 = vst [vmem:[%s410 + $0x8] sm:$0xff] %v391
          %s413 = scalar_lea.vmem [#allocation7], 12
          %v414 = vld [vmem:[%s413] sm:$0xf]
          %v416 = vsel %vm262, %v414, 0
          %418 = vmatpush.bf16.msra.mxu0 0
          %419 = vmatpush.bf16.msra.mxu0 0
          %420 = vmatpush.bf16.msra.mxu0 0
          %421 = vmatpush.bf16.msra.mxu0 0
          %422 = vmatpush.bf16.msra.mxu0 0
          %423 = vmatpush.bf16.msra.mxu0 0
          %424 = vmatpush.bf16.msra.mxu0 0
          %425 = vmatpush.bf16.msra.mxu0 %v258
          %426 = vmatmul.bf16.gmra.mxu0 %v416
          %v427 = vpop.f32.mrf.mxu0
          %v428 = vadd.f32 0.0, %v427
          %v429 = vpop.f32.mrf.mxu0
          %430 = vdwg.mxu0
          %431 = vmatpush.bf16.msra.mxu0 0
          %432 = vmatpush.bf16.msra.mxu0 0
          %433 = vmatpush.bf16.msra.mxu0 0
          %434 = vmatpush.bf16.msra.mxu0 0
          %435 = vmatpush.bf16.msra.mxu0 0
          %436 = vmatpush.bf16.msra.mxu0 0
          %437 = vmatpush.bf16.msra.mxu0 0
          %438 = vmatpush.bf16.msra.mxu0 %v259
          %439 = vmatmul.bf16.gmra.mxu0 %v416
          %v440 = vpop.f32.mrf.mxu0
          %v441 = vadd.f32 0.0, %v440
          %v442 = vpop.f32.mrf.mxu0
          %443 = vdwg.mxu0
          %v444 = vld [vmem:[#allocation2] sm:$0xff]
          %v445 = vadd.f32 %v428, %v441
          %446 = vadd.xlane.f32.xlu0 %v445
          %v447 = vpop.xlane.xlu0 %446
          %v448 = vadd.f32 %v444, %v447
          %449 = vst.msk [vmem:[#allocation2] sm:$0xff] %vm297, %v448
          %v450 = vld [vmem:[%s299] sm:$0xff]
          %v451 = vmul.f32 %v428, %v428
          %v452 = vmul.f32 %v441, %v441
          %v453 = vadd.f32 %v451, %v452
          %454 = vadd.xlane.f32.xlu0 %v453
          %v455 = vpop.xlane.xlu0 %454
          %v456 = vadd.f32 %v450, %v455
          %457 = vst.msk [vmem:[%s299] sm:$0xff] %vm297, %v456
          %s458 = sadd.s32 6, %s308
          %s459 = smul.addr %s458, 8
          %s460 = scalar_lea.vmem [#allocation3], %s459
          %461 = vst [vmem:[%s460] sm:$0xff] %v428
          %462 = vst [vmem:[%s460 + $0x8] sm:$0xff] %v441
        $region44: #{tpu_custom_call.1} parent=27 // pred_fallthru
          _
        %p463 = scmp.eq.s32.totalorder %s28, 1
        // Predicated region
        $region45: #{tpu_custom_call.1} parent=27 // pred_check
          %p464 = pneg %p463
        $region46: #{tpu_custom_call.1} parent=27 // pred_check_branch
          %466 = sbr.rel (%p464) target = $region48
        $region47: #{tpu_custom_call.1} parent=27 // pred_region
          %v467 = vld [vmem:[#allocation2] sm:$0xff]
          %v468 = vmul.f32 %v467, 0.0009765625
          %s469 = scalar_lea.vmem [#allocation2], 8
          %v470 = vld [vmem:[%s469] sm:$0xff]
          %v471 = vmul.f32 %v470, 0.0009765625
          %v472 = vmul.f32 %v468, %v468
          %v473 = vsub.f32 %v471, %v472
          %v474 = vadd.f32 %v473, 1e-05
          %v475 = vrsqrt.pop %v474
          %v476 = vmul.f32 %v475, %v474
          %v477 = vmul.f32 %v476, %v475
          %v478 = vmul.f32 0.5, %v477
          %v479 = vsub.f32 1.5, %v478
          %v480 = vmul.f32 %v475, %v479
          %vm481 = vweird.f32 %v474
          %vm482 = vweird.f32 %v475
          %vm483 = vmor %vm481, %vm482
          %v484 = vsel %vm483, %v475, %v480
          %s485 = smul.u32 %s29, 8
          %s486 = smul.addr %s485, 8
          %s487 = scalar_lea.vmem [#allocation3], %s486
          %v488 = vld [vmem:[%s487] sm:$0xff]
          %v489 = vld [vmem:[%s487 + $0x8] sm:$0xff]
          %491 = vset.pattern.permute.xlu0 0
          %492 = vperm.xlu0 %491, %v468
          %v493 = vpop.permute.xlu0 %492
          %v495 = vsub.f32 %v488, %v493
          %v496 = vsub.f32 %v489, %v493
          %498 = vset.pattern.permute.xlu0 0
          %499 = vperm.xlu0 %498, %v484
          %v500 = vpop.permute.xlu0 %499
          %v502 = vmul.f32 %v495, %v500
          %v503 = vmul.f32 %v496, %v500
          %v504 = vmax.f32 %v502, 0.0
          %v505 = vmax.f32 %v503, 0.0
          %506 = vst [vmem:[%s230] sm:$0xff] %v504
          %507 = vst [vmem:[%s230 + $0x8] sm:$0xff] %v505
          %s508 = sadd.s32 2, %s485
          %s509 = smul.addr %s508, 8
          %s510 = scalar_lea.vmem [#allocation3], %s509
          %v511 = vld [vmem:[%s510] sm:$0xff]
          %v512 = vld [vmem:[%s510 + $0x8] sm:$0xff]
          %v513 = vsub.f32 %v511, %v493
          %v514 = vsub.f32 %v512, %v493
          %v515 = vmul.f32 %v513, %v500
          %v516 = vmul.f32 %v514, %v500
          %v517 = vmax.f32 %v515, 0.0
          %v518 = vmax.f32 %v516, 0.0
          %s519 = scalar_lea.vmem %s230, 16 [#allocation9]
          %520 = vst [vmem:[%s519] sm:$0xff] %v517
          %521 = vst [vmem:[%s519 + $0x8] sm:$0xff] %v518
          %s522 = sadd.s32 4, %s485
          %s523 = smul.addr %s522, 8
          %s524 = scalar_lea.vmem [#allocation3], %s523
          %v525 = vld [vmem:[%s524] sm:$0xff]
          %v526 = vld [vmem:[%s524 + $0x8] sm:$0xff]
          %v527 = vsub.f32 %v525, %v493
          %v528 = vsub.f32 %v526, %v493
          %v529 = vmul.f32 %v527, %v500
          %v530 = vmul.f32 %v528, %v500
          %v531 = vmax.f32 %v529, 0.0
          %v532 = vmax.f32 %v530, 0.0
          %s533 = scalar_lea.vmem %s230, 32 [#allocation9]
          %534 = vst [vmem:[%s533] sm:$0xff] %v531
          %535 = vst [vmem:[%s533 + $0x8] sm:$0xff] %v532
          %s536 = sadd.s32 6, %s485
          %s537 = smul.addr %s536, 8
          %s538 = scalar_lea.vmem [#allocation3], %s537
          %v539 = vld [vmem:[%s538] sm:$0xff]
          %v540 = vld [vmem:[%s538 + $0x8] sm:$0xff]
          %v541 = vsub.f32 %v539, %v493
          %v542 = vsub.f32 %v540, %v493
          %v543 = vmul.f32 %v541, %v500
          %v544 = vmul.f32 %v542, %v500
          %v545 = vmax.f32 %v543, 0.0
          %v546 = vmax.f32 %v544, 0.0
          %s547 = scalar_lea.vmem %s230, 48 [#allocation9]
          %548 = vst [vmem:[%s547] sm:$0xff] %v545
          %549 = vst [vmem:[%s547 + $0x8] sm:$0xff] %v546
        $region48: #{tpu_custom_call.1} parent=27 // pred_fallthru
          _
        %s550 = sand.u32 %s118, 1
        %s551 = scalar_lea.sflag [#allocation6], %s550
        %s552 = sand.u32 %s118, 1
        %s553 = smul.addr %s552, 64
        %s554 = scalar_lea.vmem [#allocation9], %s553
        // Predicated region
        $region49: #{tpu_custom_call.1} parent=27 // pred_check
          %p555 = pneg %p128
        $region50: #{tpu_custom_call.1} parent=27 // pred_check_branch
          %557 = sbr.rel (%p555) target = $region52
        $region51: #{tpu_custom_call.1} parent=27 // pred_region
          %s558 = smul.u32 %s29, %s28
          %s559 = smul.u32 2, %s558
          %561 = vsyncadd %s551, 0
          %s562 = smul.addr %s27, 8
          %s563 = sadd.s32 %s559, %s562
          %s564 = smul.addr %s26, 8
          %s565 = sadd.s32 %s563, %s564
          %s566 = smul.addr %s565, 8
          %s567 = scalar_lea.hbm %s2, %s566
          %s568 = sshll.u32 %s554, 4
          %s569 = int_to_ptr.vmem [resolvable:$true] %s568
          %s570 = sshll.u32 %s567, 4
          %s571 = int_to_ptr.hbm [resolvable:$true] %s570
          %576 = dma.vmem_to_hbm [thread:$0]  %s569, 1024, %s571, %s551, 256, 256, 16
        $region52: #{tpu_custom_call.1} parent=27 // pred_fallthru
          _
      $region28: #{tpu_custom_call.1} parent=5 // pred_fallthru
        _
      %p577 = scmp.le.s32.totalorder 2, %s15
      // Predicated region
      $region53: #{tpu_custom_call.1} parent=5 // pred_check
        %p578 = pneg %p577
      $region54: #{tpu_custom_call.1} parent=5 // pred_check_branch
        %580 = sbr.rel (%p578) target = $region56
      $region55: #{tpu_custom_call.1} parent=5 // pred_region
        %s581 = ssub.s32 %s15, 2
        // Predicated region
        $region57: #{tpu_custom_call.1} parent=55 // pred_check
          %p582 = pneg %p134
        $region58: #{tpu_custom_call.1} parent=55 // pred_check_branch
          %584 = sbr.rel (%p582) target = $region60
        $region59: #{tpu_custom_call.1} parent=55 // pred_region
          %s585 = sand.u32 %s119, 1
          %s586 = scalar_lea.sflag [#allocation6], %s585
          %s587 = sand.u32 %s119, 1
          %s588 = smul.addr %s587, 64
          %s589 = scalar_lea.vmem [#allocation9], %s588
          %591 = dma.done %s586, 1024
        $region60: #{tpu_custom_call.1} parent=55 // pred_fallthru
          _
      $region56: #{tpu_custom_call.1} parent=5 // pred_fallthru
        _
    $region6: #{tpu_custom_call.1} parent=1 // loop_footer
      %s19 = sadd.s32 1, %s15
    $region7: #{tpu_custom_call.1} parent=1 // loop_footer_branch
      %14 = sbr.rel target = $region3
    $region8: #{tpu_custom_call.1} parent=1 // loop_exit
      _
    %592 = vsyncpa [#allocation5], 1
    %s593 = scalar_lea.sflag [#allocation5], 1
    %594 = vsyncpa %s593, 1
    %595 = vsyncpa [#allocation8], 1
    %596 = vsyncpa [#allocation6], 1
    %s597 = scalar_lea.sflag [#allocation6], 1
    %598 = vsyncpa %s597, 1

</llo_original>
